<compile_context>
chip_gen: v7x
topology: tpu7x:2x2x1
jax: 0.10.0
libtpu: 0.0.40
codegen_flags: <defaults>
</compile_context>

<pallas_src>
import functools

import jax
import jax.numpy as jnp
from jax.experimental import pallas as pl
from jax.experimental.pallas import tpu as pltpu


def _round_up(a, b):
    return pl.cdiv(a, b) * b


def _focal_kernel(x_ref, t_ref, o_ref, *, num_classes, alpha, gamma, eps,
                  reduce_out, h, w, th, tw, mask_h, mask_w):
    """x_ref: (C, TH, TW) logits tile, t_ref: (TH, TW) int32 labels.

    reduce_out=False: o_ref is the (TH, TW) per-pixel focal-loss tile.
    reduce_out=True : o_ref is a per-batch (1, 1) f32 running-sum accumulator.
    """
    t = t_ref[...]                                            # (TH, TW) int32

    # Running max over classes: Python loop of plain rank-2 vector ops.
    m = x_ref[0].astype(jnp.float32)
    for c in range(1, num_classes):
        m = jnp.maximum(m, x_ref[c].astype(jnp.float32))

    # One streaming pass over classes: softmax denominator + target-class
    # logit gathered with a scalar compare (no one-hot materialization).
    sum_exp = jnp.zeros_like(m)
    x_t = jnp.zeros_like(m)
    for c in range(num_classes):
        xc = x_ref[c].astype(jnp.float32)
        sum_exp = sum_exp + jnp.exp(xc - m)
        x_t = x_t + jnp.where(t == c, xc, 0.0)

    lse = m + jnp.log(sum_exp)                                # logsumexp_c(x)
    p_t = jnp.exp(x_t - lse) + eps                            # softmax_t + eps
    one_minus = 1.0 - p_t
    if float(gamma).is_integer():
        weight = one_minus ** int(gamma)                      # integer_pow (VPU)
    else:
        # TODO(synk): general float gamma via exp(gamma*log(.)); matches
        # torch.pow only for positive bases (p_t can exceed 1 by eps).
        weight = jnp.exp(gamma * jnp.log(jnp.maximum(one_minus, 1e-30)))
    # TODO(synk): on v7x, log(p_t) could be replaced by (x_t - lse) to shave
    # an EUP op, but that drops the eps term; keep exact parity with torch.
    loss = (-alpha) * weight * jnp.log(p_t)                   # (TH, TW)

    if not reduce_out:
        o_ref[...] = loss.astype(o_ref.dtype)                 # OOB rows/cols masked by Pallas
        return

    # 'mean'/'sum': accumulate a per-batch partial sum.  Ragged last blocks
    # read garbage in OOB rows/cols, so mask them before summing.
    i = pl.program_id(1)
    j = pl.program_id(2)
    if mask_h:
        row = jax.lax.broadcasted_iota(jnp.int32, loss.shape, 0)
        loss = jnp.where(row + i * th < h, loss, 0.0)
    if mask_w:
        col = jax.lax.broadcasted_iota(jnp.int32, loss.shape, 1)
        loss = jnp.where(col + j * tw < w, loss, 0.0)
    part = jnp.sum(jnp.sum(loss, axis=1, keepdims=True), axis=0, keepdims=True)

    @pl.when((i == 0) & (j == 0))
    def _():
        o_ref[...] = jnp.zeros_like(o_ref)

    o_ref[...] += part


def focal_loss_pallas(logits, target, alpha, gamma=2.0, reduction="none",
                      eps=1e-8):
    if logits.ndim != 4:
        raise ValueError(f"Expected NCHW logits, got shape {logits.shape}")
    N, C, H, W = logits.shape
    if target.shape != (N, H, W):
        raise ValueError(f"Expected target shape {(N, H, W)}, got {target.shape}")
    if reduction not in ("none", "mean", "sum"):
        raise NotImplementedError(f"Invalid reduction mode: {reduction}")

    t = target.astype(jnp.int32)
    out_dtype = (logits.dtype if jnp.issubdtype(logits.dtype, jnp.floating)
                 else jnp.float32)
    x_item = jnp.dtype(logits.dtype).itemsize
    o_item = jnp.dtype(out_dtype).itemsize

    # --- tile sizing -------------------------------------------------------
    # ~8 MiB of logits / <=~24 MiB double-buffered working set per grid step:
    # amortizes per-step overhead on v7x's fast HBM while staying inside the
    # 32 MiB scoped-VMEM limit requested below (safe on v5e/v6e/v7x).
    bytes_per_px = C * x_item + 4 + o_item          # logits + label + loss
    px_budget = max(128, min((8 << 20) // (C * x_item),
                             (12 << 20) // bytes_per_px))

    rows = px_budget // W
    if rows >= H:                        # whole (C, H, W) image per step
        th, tw = H, W
    elif rows >= 8:                      # block the H axis (sublane-aligned)
        th, tw = (rows // 8) * 8, W
    else:                                # single rows are huge: block W too
        th = min(8, H)
        tw = max(128, (px_budget // th // 128) * 128)
        if tw >= W:
            tw = W
    ht, wt = pl.cdiv(H, th), pl.cdiv(W, tw)

    # Megacore: guarantee >=2 grid steps so both v7x TensorCores get work
    # (no effect on the single-core v5e/v6e).
    if N * ht * wt < 2:
        if H >= 9:
            th = max(8, _round_up(pl.cdiv(H, 2), 8))
            ht = pl.cdiv(H, th)
        elif W >= 256:
            tw = _round_up(pl.cdiv(W, 2), 128)
            wt = pl.cdiv(W, tw)

    grid = (N, ht, wt)
    reduce_out = reduction in ("mean", "sum")

    kernel = functools.partial(
        _focal_kernel, num_classes=C, alpha=float(alpha), gamma=float(gamma),
        eps=float(eps), reduce_out=reduce_out, h=H, w=W, th=th, tw=tw,
        mask_h=(H % th != 0), mask_w=(W % tw != 0))

    in_specs = [
        # NCHW-native blocking: no relayout of the logits; sublane axis is
        # image rows (dense) instead of the (small) class count.
        pl.BlockSpec((None, C, th, tw), lambda n, i, j: (n, 0, i, j)),
        pl.BlockSpec((None, th, tw), lambda n, i, j: (n, i, j)),
    ]

    if not reduce_out:
        out_shape = jax.ShapeDtypeStruct((N, H, W), out_dtype)
        out_specs = pl.BlockSpec((None, th, tw), lambda n, i, j: (n, i, j))
        semantics = ("parallel", "parallel", "parallel")
    else:
        # Per-batch running sum in a resident (1,1) output block: avoids
        # writing the full (N, H, W) map to HBM and re-reading it.
        out_shape = jax.ShapeDtypeStruct((N, 1, 1), jnp.float32)
        out_specs = pl.BlockSpec((None, 1, 1), lambda n, i, j: (n, 0, 0))
        semantics = ("parallel", "arbitrary", "arbitrary")

    out = pl.pallas_call(
        kernel,
        out_shape=out_shape,
        grid_spec=pltpu.PrefetchScalarGridSpec(
            num_scalar_prefetch=0,
            grid=grid,
            in_specs=in_specs,
            out_specs=out_specs,
        ),
        compiler_params=pltpu.CompilerParams(
            dimension_semantics=semantics,
            vmem_limit_bytes=32 * 1024 * 1024),
    )(logits, t)

    if reduction == "none":
        return out
    total = jnp.sum(out)
    if reduction == "sum":
        return total.astype(out_dtype)
    return (total / (N * H * W)).astype(out_dtype)


def _focal_loss_ref(logits, target, alpha, gamma=2.0, reduction="none",
                    eps=1e-8):
    """Pure-JAX reference mirroring the PyTorch implementation."""
    p = jax.nn.softmax(logits.astype(jnp.float32), axis=1) + eps
    one_hot = jax.nn.one_hot(target, logits.shape[1], axis=1, dtype=jnp.float32)
    weight = (1.0 - p) ** gamma
    focal = -alpha * weight * jnp.log(p)
    loss = jnp.sum(one_hot * focal, axis=1)
    if reduction == "none":
        return loss
    elif reduction == "mean":
        return jnp.mean(loss)
    return jnp.sum(loss)


if __name__ == "__main__":
    key = jax.random.PRNGKey(0)
    ks = jax.random.split(key, 8)
    alpha, eps = 0.5, 1e-8

    def check(name, logits, target, gamma, reduction, rtol, atol=1e-5):
        got = jax.block_until_ready(
            focal_loss_pallas(logits, target, alpha, gamma, reduction, eps))
        want = _focal_loss_ref(logits, target, alpha, gamma, reduction, eps)
        assert got.shape == want.shape, (name, got.shape, want.shape)
        assert jnp.allclose(got, want, rtol=rtol, atol=atol), f"mismatch: {name}"

    # case 1: (2, 4, 16, 16) -- single full tile per batch image.
    l1 = jax.random.normal(ks[0], (2, 4, 16, 16), dtype=jnp.float32)
    t1 = jax.random.randint(ks[1], (2, 16, 16), 0, 4, dtype=jnp.int32)
    check("c1-none", l1, t1, 2.0, "none", 1e-5)
    check("c1-mean", l1, t1, 2.0, "mean", 1e-4)
    check("c1-gamma2.5-none", l1, t1, 2.5, "none", 1e-4)

    # case 2: odd tiny spatial size (2, 4, 5, 7).
    l2 = jax.random.normal(ks[2], (2, 4, 5, 7), dtype=jnp.float32)
    t2 = jax.random.randint(ks[3], (2, 5, 7), 0, 4, dtype=jnp.int32)
    check("c2-none", l2, t2, 2.0, "none", 1e-5)
    check("c2-sum", l2, t2, 2.0, "sum", 1e-4)

    # case 3: N=1 with H split for megacore + ragged last H block.
    l3 = jax.random.normal(ks[4], (1, 3, 20, 160), dtype=jnp.float32)
    t3 = jax.random.randint(ks[5], (1, 20, 160), 0, 3, dtype=jnp.int32)
    check("c3-none", l3, t3, 2.0, "none", 1e-5)
    check("c3-mean", l3, t3, 2.0, "mean", 1e-4)

    # case 4: N=1 with W split for megacore + ragged last W block.
    l4 = jax.random.normal(ks[6], (1, 4, 4, 300), dtype=jnp.float32)
    t4 = jax.random.randint(ks[7], (1, 4, 300), 0, 4, dtype=jnp.int32)
    check("c4-none", l4, t4, 2.0, "none", 1e-5)
    check("c4-mean", l4, t4, 2.0, "mean", 1e-4)

    print("KERNEL_OK")
</pallas_src>

<mosaic_0001>
module attributes {stable_mosaic.version = 11 : i64} {
  func.func @_focal_kernel(%arg0: i32, %arg1: i32, %arg2: i32, %arg3: memref<1x4x16x16xf32, #tpu.memory_space<vmem>>, %arg4: memref<1x16x16xi32, #tpu.memory_space<vmem>>, %arg5: memref<1x16x16xf32, #tpu.memory_space<vmem>>) attributes {dimension_semantics = [#tpu.dimension_semantics<parallel>, #tpu.dimension_semantics<parallel>, #tpu.dimension_semantics<parallel>], iteration_bounds = array<i64: 2, 1, 1>, scalar_prefetch = 0 : i64, scratch_operands = 0 : i64, tpu.core_type = #tpu.core_type<tc>, window_params = [{transform_indices = @transform_0, window_bounds = array<i64: 1, 4, 16, 16>}, {transform_indices = @transform_1, window_bounds = array<i64: 1, 16, 16>}, {transform_indices = @transform_2, window_bounds = array<i64: 1, 16, 16>}]} {
    %c0 = arith.constant 0 : index
    %c0_0 = arith.constant 0 : index
    %c0_1 = arith.constant 0 : index
    %0 = vector.load %arg4[%c0, %c0_0, %c0_1] : memref<1x16x16xi32, #tpu.memory_space<vmem>>, vector<1x16x16xi32>
    %1 = vector.shape_cast %0 : vector<1x16x16xi32> to vector<16x16xi32>
    %c0_2 = arith.constant 0 : index
    %c0_3 = arith.constant 0 : index
    %c0_4 = arith.constant 0 : index
    %c0_5 = arith.constant 0 : index
    %2 = vector.load %arg3[%c0_2, %c0_3, %c0_4, %c0_5] : memref<1x4x16x16xf32, #tpu.memory_space<vmem>>, vector<1x1x16x16xf32>
    %3 = vector.shape_cast %2 : vector<1x1x16x16xf32> to vector<16x16xf32>
    %c0_6 = arith.constant 0 : index
    %c1 = arith.constant 1 : index
    %c0_7 = arith.constant 0 : index
    %c0_8 = arith.constant 0 : index
    %4 = vector.load %arg3[%c0_6, %c1, %c0_7, %c0_8] : memref<1x4x16x16xf32, #tpu.memory_space<vmem>>, vector<1x1x16x16xf32>
    %5 = vector.shape_cast %4 : vector<1x1x16x16xf32> to vector<16x16xf32>
    %6 = arith.maximumf %3, %5 : vector<16x16xf32>
    %c0_9 = arith.constant 0 : index
    %c2 = arith.constant 2 : index
    %c0_10 = arith.constant 0 : index
    %c0_11 = arith.constant 0 : index
    %7 = vector.load %arg3[%c0_9, %c2, %c0_10, %c0_11] : memref<1x4x16x16xf32, #tpu.memory_space<vmem>>, vector<1x1x16x16xf32>
    %8 = vector.shape_cast %7 : vector<1x1x16x16xf32> to vector<16x16xf32>
    %9 = arith.maximumf %6, %8 : vector<16x16xf32>
    %c0_12 = arith.constant 0 : index
    %c3 = arith.constant 3 : index
    %c0_13 = arith.constant 0 : index
    %c0_14 = arith.constant 0 : index
    %10 = vector.load %arg3[%c0_12, %c3, %c0_13, %c0_14] : memref<1x4x16x16xf32, #tpu.memory_space<vmem>>, vector<1x1x16x16xf32>
    %11 = vector.shape_cast %10 : vector<1x1x16x16xf32> to vector<16x16xf32>
    %12 = arith.maximumf %9, %11 : vector<16x16xf32>
    %cst = arith.constant 0.000000e+00 : f32
    %13 = vector.broadcast %cst : f32 to vector<16x16xf32>
    %cst_15 = arith.constant 0.000000e+00 : f32
    %14 = vector.broadcast %cst_15 : f32 to vector<16x16xf32>
    %c0_16 = arith.constant 0 : index
    %c0_17 = arith.constant 0 : index
    %c0_18 = arith.constant 0 : index
    %c0_19 = arith.constant 0 : index
    %15 = vector.load %arg3[%c0_16, %c0_17, %c0_18, %c0_19] : memref<1x4x16x16xf32, #tpu.memory_space<vmem>>, vector<1x1x16x16xf32>
    %16 = vector.shape_cast %15 : vector<1x1x16x16xf32> to vector<16x16xf32>
    %17 = arith.subf %16, %12 : vector<16x16xf32>
    %18 = math.exp %17 : vector<16x16xf32>
    %19 = arith.addf %13, %18 : vector<16x16xf32>
    %c0_i32 = arith.constant 0 : i32
    %20 = vector.broadcast %c0_i32 : i32 to vector<16x16xi32>
    %21 = arith.cmpi eq, %1, %20 : vector<16x16xi32>
    %cst_20 = arith.constant 0.000000e+00 : f32
    %22 = vector.broadcast %cst_20 : f32 to vector<16x16xf32>
    %23 = arith.select %21, %16, %22 : vector<16x16xi1>, vector<16x16xf32>
    %24 = arith.addf %14, %23 : vector<16x16xf32>
    %c0_21 = arith.constant 0 : index
    %c1_22 = arith.constant 1 : index
    %c0_23 = arith.constant 0 : index
    %c0_24 = arith.constant 0 : index
    %25 = vector.load %arg3[%c0_21, %c1_22, %c0_23, %c0_24] : memref<1x4x16x16xf32, #tpu.memory_space<vmem>>, vector<1x1x16x16xf32>
    %26 = vector.shape_cast %25 : vector<1x1x16x16xf32> to vector<16x16xf32>
    %27 = arith.subf %26, %12 : vector<16x16xf32>
    %28 = math.exp %27 : vector<16x16xf32>
    %29 = arith.addf %19, %28 : vector<16x16xf32>
    %c1_i32 = arith.constant 1 : i32
    %30 = vector.broadcast %c1_i32 : i32 to vector<16x16xi32>
    %31 = arith.cmpi eq, %1, %30 : vector<16x16xi32>
    %cst_25 = arith.constant 0.000000e+00 : f32
    %32 = vector.broadcast %cst_25 : f32 to vector<16x16xf32>
    %33 = arith.select %31, %26, %32 : vector<16x16xi1>, vector<16x16xf32>
    %34 = arith.addf %24, %33 : vector<16x16xf32>
    %c0_26 = arith.constant 0 : index
    %c2_27 = arith.constant 2 : index
    %c0_28 = arith.constant 0 : index
    %c0_29 = arith.constant 0 : index
    %35 = vector.load %arg3[%c0_26, %c2_27, %c0_28, %c0_29] : memref<1x4x16x16xf32, #tpu.memory_space<vmem>>, vector<1x1x16x16xf32>
    %36 = vector.shape_cast %35 : vector<1x1x16x16xf32> to vector<16x16xf32>
    %37 = arith.subf %36, %12 : vector<16x16xf32>
    %38 = math.exp %37 : vector<16x16xf32>
    %39 = arith.addf %29, %38 : vector<16x16xf32>
    %c2_i32 = arith.constant 2 : i32
    %40 = vector.broadcast %c2_i32 : i32 to vector<16x16xi32>
    %41 = arith.cmpi eq, %1, %40 : vector<16x16xi32>
    %cst_30 = arith.constant 0.000000e+00 : f32
    %42 = vector.broadcast %cst_30 : f32 to vector<16x16xf32>
    %43 = arith.select %41, %36, %42 : vector<16x16xi1>, vector<16x16xf32>
    %44 = arith.addf %34, %43 : vector<16x16xf32>
    %c0_31 = arith.constant 0 : index
    %c3_32 = arith.constant 3 : index
    %c0_33 = arith.constant 0 : index
    %c0_34 = arith.constant 0 : index
    %45 = vector.load %arg3[%c0_31, %c3_32, %c0_33, %c0_34] : memref<1x4x16x16xf32, #tpu.memory_space<vmem>>, vector<1x1x16x16xf32>
    %46 = vector.shape_cast %45 : vector<1x1x16x16xf32> to vector<16x16xf32>
    %47 = arith.subf %46, %12 : vector<16x16xf32>
    %48 = math.exp %47 : vector<16x16xf32>
    %49 = arith.addf %39, %48 : vector<16x16xf32>
    %c3_i32 = arith.constant 3 : i32
    %50 = vector.broadcast %c3_i32 : i32 to vector<16x16xi32>
    %51 = arith.cmpi eq, %1, %50 : vector<16x16xi32>
    %cst_35 = arith.constant 0.000000e+00 : f32
    %52 = vector.broadcast %cst_35 : f32 to vector<16x16xf32>
    %53 = arith.select %51, %46, %52 : vector<16x16xi1>, vector<16x16xf32>
    %54 = arith.addf %44, %53 : vector<16x16xf32>
    %55 = math.log %49 : vector<16x16xf32>
    %56 = arith.addf %12, %55 : vector<16x16xf32>
    %57 = arith.subf %54, %56 : vector<16x16xf32>
    %58 = math.exp %57 : vector<16x16xf32>
    %cst_36 = arith.constant 9.99999993E-9 : f32
    %59 = vector.broadcast %cst_36 : f32 to vector<16x16xf32>
    %60 = arith.addf %58, %59 : vector<16x16xf32>
    %cst_37 = arith.constant 1.000000e+00 : f32
    %61 = vector.broadcast %cst_37 : f32 to vector<16x16xf32>
    %62 = arith.subf %61, %60 : vector<16x16xf32>
    %63 = arith.mulf %62, %62 : vector<16x16xf32>
    %cst_38 = arith.constant -5.000000e-01 : f32
    %64 = vector.broadcast %cst_38 : f32 to vector<16x16xf32>
    %65 = arith.mulf %64, %63 : vector<16x16xf32>
    %66 = math.log %60 : vector<16x16xf32>
    %67 = arith.mulf %65, %66 : vector<16x16xf32>
    %c0_39 = arith.constant 0 : index
    %c0_40 = arith.constant 0 : index
    %c0_41 = arith.constant 0 : index
    %68 = vector.load %arg5[%c0_39, %c0_40, %c0_41] : memref<1x16x16xf32, #tpu.memory_space<vmem>>, vector<1x16x16xf32>
    %69 = vector.shape_cast %68 : vector<1x16x16xf32> to vector<16x16xf32>
    %70 = vector.shape_cast %67 : vector<16x16xf32> to vector<1x16x16xf32>
    tpu.vector_store %arg5[%c0_39, %c0_40, %c0_41], %70 {strides = array<i32>} : memref<1x16x16xf32, #tpu.memory_space<vmem>>, vector<1x16x16xf32>,
    return
  }
  func.func @transform_0(%arg0: i32, %arg1: i32, %arg2: i32) -> (i32, i32, i32, i32) {
    %c0_i32 = arith.constant 0 : i32
    %c0_i32_0 = arith.constant 0 : i32
    return %arg0, %c0_i32, %arg1, %arg2 : i32, i32, i32, i32
  }
  func.func @transform_1(%arg0: i32, %arg1: i32, %arg2: i32) -> (i32, i32, i32) {
    %c0_i32 = arith.constant 0 : i32
    return %arg0, %arg1, %arg2 : i32, i32, i32
  }
  func.func @transform_2(%arg0: i32, %arg1: i32, %arg2: i32) -> (i32, i32, i32) {
    %c0_i32 = arith.constant 0 : i32
    return %arg0, %arg1, %arg2 : i32, i32, i32
  }
}

</mosaic_0001>

<llo_original>
// kernel: tpu_custom_call.1
$region0: #{tpu_custom_call.1}
  #allocation0 [shape = 'u32[]', space=smem, size = 0x4, offset = 0x4, fixed_abs, tag = 'smem constant byte address 0x4 - core index']
  #allocation1 [shape = 'u32[144,128]{1,0:T(1,128)}', space=vmem, size = 0x12000, scoped, tag = 'internal scratch']
  %s0 = inlined_call_operand.hbm [shape: f32[2,4,16,16], index: 0, kind: input, shape index: {}]
  %s1 = inlined_call_operand.hbm [shape: s32[2,16,16], index: 1, kind: input, shape index: {}]
  %s2 = inlined_call_operand.hbm [shape: f32[2,16,16], index: 2, kind: output, shape index: {}]
  %s3 = sld [smem:[#allocation0]]
  $region49: #{tpu_custom_call.1} parent=0
    _
  %s5 = ssub.s32 1, %s3
  %s6 = scalar_select 0, %s5, %s3
  $region1: #{tpu_custom_call.1} parent=0
    #allocation2 [shape = 'u8[65536]{0}', space=vmem, size = 0x10000, scoped, tag = 'input window, operand 0']
    #allocation3 [shape = 's32[2]{0}', space=sflag, size = 0x8, scoped, tag = 'scoped memory for tpu_custom_call.1']
    #allocation4 [shape = 's32[2]{0}', space=sflag, size = 0x8, scoped, tag = 'scoped memory for tpu_custom_call.1']
    #allocation5 [shape = 'u8[16384]{0}', space=vmem, size = 0x4000, scoped, tag = 'input window, operand 1']
    #allocation6 [shape = 's32[2]{0}', space=sflag, size = 0x8, scoped, tag = 'scoped memory for tpu_custom_call.1']
    #allocation7 [shape = 'u8[16384]{0}', space=vmem, size = 0x4000, scoped, tag = 'output window, operand 0']
    %7 = vsyncpa [#allocation3], 0
    %s8 = scalar_lea.sflag [#allocation3], 1
    %9 = vsyncpa %s8, 0
    %10 = vsyncpa [#allocation6], 0
    %s11 = scalar_lea.sflag [#allocation6], 1
    %12 = vsyncpa %s11, 0
    %13 = vsyncpa [#allocation4], 0
    %s14 = scalar_lea.sflag [#allocation4], 1
    %15 = vsyncpa %s14, 0
    loop: start=0, step=1, limit=4
    $region2: #{tpu_custom_call.1} parent=1 // loop_pre_header
      _
    $region3: #{tpu_custom_call.1} parent=1 // loop_header
      %s17 = sphi 0, %s21
      %p18 = scmp.ge.s32.totalorder %s17, 4
      %s24 = sphi 0, %s43
      %s25 = sphi 0, %s39
      %s26 = sphi 0, %s35
      %s27 = sphi 0, %s24
      %s28 = sphi 0, %s25
      %s29 = sphi 0, %s26
      %s30 = sphi 0, %s27
      %s31 = sphi 0, %s28
      %s32 = sphi 0, %s29
      %s50 = sphi 0, %s52
      %s53 = sphi 0, %s50
      %s54 = sphi 0, %s53
      %s70 = sphi 0, %s54
      %s80 = sphi 0, %s82
      %s83 = sphi 0, %s80
      %s84 = sphi 0, %s83
      %s100 = sphi 0, %s84
      %s110 = sphi 0, %s112
      %s113 = sphi 0, %s110
      %s114 = sphi 0, %s113
      %s130 = sphi 0, %s114
    $region4: #{tpu_custom_call.1} parent=1 // loop_header_branch
      %20 = sbr.rel (%p18) target = $region8
    $region5: #{tpu_custom_call.1} parent=1 // loop_body
      %s22 = ssub.s32 %s17, 1
      %s23 = ssub.s32 %s17, 2
      %s33 = sadd.s32 1, %s26
      %p34 = scmp.ge.s32.totalorder %s33, 1
      %s35 = scalar_select %p34, 0, %s33
      %s36 = sadd.s32 1, %s25
      %s37 = scalar_select %p34, %s36, %s25
      %p38 = scmp.ge.s32.totalorder %s37, 1
      %s39 = scalar_select %p38, 0, %s37
      %s40 = sadd.s32 1, %s24
      %s41 = scalar_select %p38, %s40, %s24
      %p42 = scmp.ge.s32.totalorder %s41, 2
      %s43 = scalar_select %p42, 0, %s41
      %s44 = ssub.s32 %s24, %s43
      %s45 = ssub.s32 %s25, %s39
      %s46 = sor.u32 %s44, %s45
      %s47 = ssub.s32 %s26, %s35
      %s48 = sor.u32 %s46, %s47
      %p49 = scmp.eq.s32.totalorder %s48, 0
      %s51 = sadd.s32 %s50, 1
      %s52 = scalar_select %p49, %s50, %s51
      %p55 = pneg %p49
      %p56 = scmp.eq.s32.totalorder %s17, 1
      %p57 = por %p55, %p56
      %p58 = scmp.ne.s32.totalorder %s50, %s53
      %p59 = scmp.eq.s32.totalorder %s17, 0
      %p60 = por %p58, %p59
      %p61 = scmp.ne.s32.totalorder %s50, %s53
      %p62 = scmp.eq.s32.totalorder %s22, 1
      %p63 = por %p61, %p62
      %p64 = scmp.ne.s32.totalorder %s53, %s54
      %p65 = scmp.eq.s32.totalorder %s22, 0
      %p66 = por %p64, %p65
      %p67 = scmp.ne.s32.totalorder %s53, %s54
      %p68 = scmp.eq.s32.totalorder %s23, 1
      %p69 = por %p67, %p68
      %p71 = scmp.ne.s32.totalorder %s54, %s70
      %p72 = scmp.eq.s32.totalorder %s23, 0
      %p73 = por %p71, %p72
      %s74 = ssub.s32 %s24, %s43
      %s75 = ssub.s32 %s25, %s39
      %s76 = sor.u32 %s74, %s75
      %s77 = ssub.s32 %s26, %s35
      %s78 = sor.u32 %s76, %s77
      %p79 = scmp.eq.s32.totalorder %s78, 0
      %s81 = sadd.s32 %s80, 1
      %s82 = scalar_select %p79, %s80, %s81
      %p85 = pneg %p79
      %p86 = scmp.eq.s32.totalorder %s17, 1
      %p87 = por %p85, %p86
      %p88 = scmp.ne.s32.totalorder %s80, %s83
      %p89 = scmp.eq.s32.totalorder %s17, 0
      %p90 = por %p88, %p89
      %p91 = scmp.ne.s32.totalorder %s80, %s83
      %p92 = scmp.eq.s32.totalorder %s22, 1
      %p93 = por %p91, %p92
      %p94 = scmp.ne.s32.totalorder %s83, %s84
      %p95 = scmp.eq.s32.totalorder %s22, 0
      %p96 = por %p94, %p95
      %p97 = scmp.ne.s32.totalorder %s83, %s84
      %p98 = scmp.eq.s32.totalorder %s23, 1
      %p99 = por %p97, %p98
      %p101 = scmp.ne.s32.totalorder %s84, %s100
      %p102 = scmp.eq.s32.totalorder %s23, 0
      %p103 = por %p101, %p102
      %s104 = ssub.s32 %s24, %s43
      %s105 = ssub.s32 %s25, %s39
      %s106 = sor.u32 %s104, %s105
      %s107 = ssub.s32 %s26, %s35
      %s108 = sor.u32 %s106, %s107
      %p109 = scmp.eq.s32.totalorder %s108, 0
      %s111 = sadd.s32 %s110, 1
      %s112 = scalar_select %p109, %s110, %s111
      %p115 = pneg %p109
      %p116 = scmp.eq.s32.totalorder %s17, 1
      %p117 = por %p115, %p116
      %p118 = scmp.ne.s32.totalorder %s110, %s113
      %p119 = scmp.eq.s32.totalorder %s17, 0
      %p120 = por %p118, %p119
      %p121 = scmp.ne.s32.totalorder %s110, %s113
      %p122 = scmp.eq.s32.totalorder %s22, 1
      %p123 = por %p121, %p122
      %p124 = scmp.ne.s32.totalorder %s113, %s114
      %p125 = scmp.eq.s32.totalorder %s22, 0
      %p126 = por %p124, %p125
      %p127 = scmp.ne.s32.totalorder %s113, %s114
      %p128 = scmp.eq.s32.totalorder %s23, 1
      %p129 = por %p127, %p128
      %p131 = scmp.ne.s32.totalorder %s114, %s130
      %p132 = scmp.eq.s32.totalorder %s23, 0
      %p133 = por %p131, %p132
      %p134 = scmp.le.s32.totalorder 1, %s17
      %p135 = scmp.lt.s32.totalorder %s17, 3
      %p136 = pnand %p134, %p135
      %p137 = pneg %p136
      // Predicated region
      $region9: #{tpu_custom_call.1} parent=5 // pred_check
        _
      $region10: #{tpu_custom_call.1} parent=5 // pred_check_branch
        %139 = sbr.rel (%p136) target = $region12
      $region11: #{tpu_custom_call.1} parent=5 // pred_region
        %s140 = ssub.s32 %s17, 1
      $region12: #{tpu_custom_call.1} parent=5 // pred_fallthru
        _
      %p141 = scmp.lt.s32.totalorder %s17, 2
      // Predicated region
      $region13: #{tpu_custom_call.1} parent=5 // pred_check
        %p142 = pneg %p141
      $region14: #{tpu_custom_call.1} parent=5 // pred_check_branch
        %144 = sbr.rel (%p142) target = $region16
      $region15: #{tpu_custom_call.1} parent=5 // pred_region
        // Predicated region
        $region17: #{tpu_custom_call.1} parent=15 // pred_check
          %p145 = pneg %p60
        $region18: #{tpu_custom_call.1} parent=15 // pred_check_branch
          %147 = sbr.rel (%p145) target = $region20
        $region19: #{tpu_custom_call.1} parent=15 // pred_region
          %s148 = sand.u32 %s50, 1
          %s149 = scalar_lea.sflag [#allocation3], %s148
          %s150 = sand.u32 %s50, 1
          %s151 = smul.addr %s150, 64
          %s152 = scalar_lea.vmem [#allocation2], %s151
          %s153 = smul.u32 2, %s25
          %s155 = ssub.s32 1024, 1024
          %156 = vsyncadd %s149, %s155
          %s157 = sadd.s32 %s26, %s153
          %s158 = smul.addr %s24, 8
          %s159 = sadd.s32 %s157, %s158
          %s160 = smul.addr %s159, 128
          %s161 = scalar_lea.hbm %s0, %s160
          %s162 = sshll.u32 %s152, 4
          %s163 = int_to_ptr.vmem [resolvable:$true] %s162
          %168 = dma.hbm_to_vmem [thread:$0]  %s161, 1024, %s163, %s149, 128, 128, 8
        $region20: #{tpu_custom_call.1} parent=15 // pred_fallthru
          _
        // Predicated region
        $region21: #{tpu_custom_call.1} parent=15 // pred_check
          %p169 = pneg %p90
        $region22: #{tpu_custom_call.1} parent=15 // pred_check_branch
          %171 = sbr.rel (%p169) target = $region24
        $region23: #{tpu_custom_call.1} parent=15 // pred_region
          %s172 = sand.u32 %s80, 1
          %s173 = scalar_lea.sflag [#allocation6], %s172
          %s174 = sand.u32 %s80, 1
          %s175 = smul.addr %s174, 16
          %s176 = scalar_lea.vmem [#allocation5], %s175
          %s177 = smul.u32 2, %s25
          %s179 = ssub.s32 256, 256
          %180 = vsyncadd %s173, %s179
          %s181 = sadd.s32 %s26, %s177
          %s182 = smul.addr %s24, 2
          %s183 = sadd.s32 %s181, %s182
          %s184 = smul.addr %s183, 128
          %s185 = scalar_lea.hbm %s1, %s184
          %s186 = sshll.u32 %s176, 4
          %s187 = int_to_ptr.vmem [resolvable:$true] %s186
          %192 = dma.hbm_to_vmem [thread:$0]  %s185, 256, %s187, %s173, 128, 128, 8
        $region24: #{tpu_custom_call.1} parent=15 // pred_fallthru
          _
      $region16: #{tpu_custom_call.1} parent=5 // pred_fallthru
        _
      %p193 = scmp.le.s32.totalorder 1, %s17
      %p194 = scmp.lt.s32.totalorder %s17, 3
      %p195 = pnand %p193, %p194
      %p196 = pneg %p195
      // Predicated region
      $region25: #{tpu_custom_call.1} parent=5 // pred_check
        _
      $region26: #{tpu_custom_call.1} parent=5 // pred_check_branch
        %198 = sbr.rel (%p195) target = $region28
      $region27: #{tpu_custom_call.1} parent=5 // pred_region
        %s199 = ssub.s32 %s17, 1
        %s200 = sand.u32 %s53, 1
        %s201 = scalar_lea.sflag [#allocation3], %s200
        %s202 = sand.u32 %s53, 1
        %s203 = smul.addr %s202, 64
        %s204 = scalar_lea.vmem [#allocation2], %s203
        // Predicated region
        $region29: #{tpu_custom_call.1} parent=27 // pred_check
          %p205 = pneg %p66
        $region30: #{tpu_custom_call.1} parent=27 // pred_check_branch
          %207 = sbr.rel (%p205) target = $region32
        $region31: #{tpu_custom_call.1} parent=27 // pred_region
          %208 = dma.done %s201, 1024
        $region32: #{tpu_custom_call.1} parent=27 // pred_fallthru
          _
        %s209 = sand.u32 %s83, 1
        %s210 = scalar_lea.sflag [#allocation6], %s209
        %s211 = sand.u32 %s83, 1
        %s212 = smul.addr %s211, 16
        %s213 = scalar_lea.vmem [#allocation5], %s212
        // Predicated region
        $region33: #{tpu_custom_call.1} parent=27 // pred_check
          %p214 = pneg %p96
        $region34: #{tpu_custom_call.1} parent=27 // pred_check_branch
          %216 = sbr.rel (%p214) target = $region36
        $region35: #{tpu_custom_call.1} parent=27 // pred_region
          %217 = dma.done %s210, 256
        $region36: #{tpu_custom_call.1} parent=27 // pred_fallthru
          _
        %s218 = sand.u32 %s53, 1
        %s219 = scalar_lea.sflag [#allocation3], %s218
        %s220 = sand.u32 %s53, 1
        %s221 = smul.addr %s220, 64
        %s222 = scalar_lea.vmem [#allocation2], %s221
        %p223 = pneg %p66
        %p224 = pneg %p63
        %s225 = sand.u32 %s83, 1
        %s226 = scalar_lea.sflag [#allocation6], %s225
        %s227 = sand.u32 %s83, 1
        %s228 = smul.addr %s227, 16
        %s229 = scalar_lea.vmem [#allocation5], %s228
        %p230 = pneg %p96
        %p231 = pneg %p93
        %p232 = pneg %p126
        %p233 = pneg %p123
        %s234 = sand.u32 %s113, 1
        %s235 = scalar_lea.sflag [#allocation4], %s234
        %s236 = sand.u32 %s113, 1
        %s237 = smul.addr %s236, 16
        %s238 = scalar_lea.vmem [#allocation7], %s237
        %s239 = smul.u32 2, %s28
        %s240 = smul.u32 2, %s28
        %s241 = smul.u32 2, %s28
        %v242 = vld [vmem:[%s213] sm:$0xff]
        %v243 = vld [vmem:[%s213 + $0x8] sm:$0xff]
        %v244 = vld [vmem:[%s204] sm:$0xff]
        %v245 = vld [vmem:[%s204 + $0x8] sm:$0xff]
        %s246 = scalar_lea.vmem %s204, 16 [#allocation2]
        %v247 = vld [vmem:[%s246] sm:$0xff]
        %v248 = vld [vmem:[%s246 + $0x8] sm:$0xff]
        %v249 = vmax.f32 %v244, %v247
        %v250 = vmax.f32 %v245, %v248
        %s251 = scalar_lea.vmem %s204, 32 [#allocation2]
        %v252 = vld [vmem:[%s251] sm:$0xff]
        %v253 = vld [vmem:[%s251 + $0x8] sm:$0xff]
        %v254 = vmax.f32 %v249, %v252
        %v255 = vmax.f32 %v250, %v253
        %s256 = scalar_lea.vmem %s204, 48 [#allocation2]
        %v257 = vld [vmem:[%s256] sm:$0xff]
        %v258 = vld [vmem:[%s256 + $0x8] sm:$0xff]
        %v259 = vmax.f32 %v254, %v257
        %v260 = vmax.f32 %v255, %v258
        %v261 = vsub.f32 %v244, %v259
        %v262 = vsub.f32 %v245, %v260
        %v263 = vmul.f32 %v261, 1.442695
        %v264 = vpow.pop %v263
        %v265 = vmul.f32 %v262, 1.442695
        %v266 = vpow.pop %v265
        %v267 = vadd.f32 %v264, 0.0
        %v268 = vadd.f32 %v266, 0.0
        %vm269 = vcmp.eq.s32.totalorder %v242, 0
        %vm270 = vcmp.eq.s32.totalorder %v243, 0
        %v271 = vsel %vm269, %v244, 0.0
        %v272 = vsel %vm270, %v245, 0.0
        %v273 = vadd.f32 %v271, 0.0
        %v274 = vadd.f32 %v272, 0.0
        %v275 = vsub.f32 %v247, %v259
        %v276 = vsub.f32 %v248, %v260
        %v277 = vmul.f32 %v275, 1.442695
        %v278 = vpow.pop %v277
        %v279 = vmul.f32 %v276, 1.442695
        %v280 = vpow.pop %v279
        %v281 = vadd.f32 %v267, %v278
        %v282 = vadd.f32 %v268, %v280
        %vm283 = vcmp.eq.s32.totalorder %v242, 1
        %vm284 = vcmp.eq.s32.totalorder %v243, 1
        %v285 = vsel %vm283, %v247, 0.0
        %v286 = vsel %vm284, %v248, 0.0
        %v287 = vadd.f32 %v273, %v285
        %v288 = vadd.f32 %v274, %v286
        %v289 = vsub.f32 %v252, %v259
        %v290 = vsub.f32 %v253, %v260
        %v291 = vmul.f32 %v289, 1.442695
        %v292 = vpow.pop %v291
        %v293 = vmul.f32 %v290, 1.442695
        %v294 = vpow.pop %v293
        %v295 = vadd.f32 %v281, %v292
        %v296 = vadd.f32 %v282, %v294
        %vm297 = vcmp.eq.s32.totalorder %v242, 2
        %vm298 = vcmp.eq.s32.totalorder %v243, 2
        %v299 = vsel %vm297, %v252, 0.0
        %v300 = vsel %vm298, %v253, 0.0
        %v301 = vadd.f32 %v287, %v299
        %v302 = vadd.f32 %v288, %v300
        %v303 = vsub.f32 %v257, %v259
        %v304 = vsub.f32 %v258, %v260
        %v305 = vmul.f32 %v303, 1.442695
        %v306 = vpow.pop %v305
        %v307 = vmul.f32 %v304, 1.442695
        %v308 = vpow.pop %v307
        %v309 = vadd.f32 %v295, %v306
        %v310 = vadd.f32 %v296, %v308
        %vm311 = vcmp.eq.s32.totalorder %v242, 3
        %vm312 = vcmp.eq.s32.totalorder %v243, 3
        %v313 = vsel %vm311, %v257, 0.0
        %v314 = vsel %vm312, %v258, 0.0
        %v315 = vadd.f32 %v301, %v313
        %v316 = vadd.f32 %v302, %v314
        %v317 = vlog2.pop %v309
        %v318 = vmul.f32 %v317, 0.6931472
        %v319 = vlog2.pop %v310
        %v320 = vmul.f32 %v319, 0.6931472
        %v321 = vadd.f32 %v259, %v318
        %v322 = vadd.f32 %v260, %v320
        %v323 = vsub.f32 %v315, %v321
        %v324 = vsub.f32 %v316, %v322
        %v325 = vmul.f32 %v323, 1.442695
        %v326 = vpow.pop %v325
        %v327 = vmul.f32 %v324, 1.442695
        %v328 = vpow.pop %v327
        %v329 = vadd.f32 %v326, 1e-08
        %v330 = vadd.f32 %v328, 1e-08
        %v331 = vsub.f32 1.0, %v329
        %v332 = vsub.f32 1.0, %v330
        %v333 = vmul.f32 %v331, %v331
        %v334 = vmul.f32 %v332, %v332
        %v335 = vmul.f32 %v333, -0.5
        %v336 = vmul.f32 %v334, -0.5
        %v337 = vlog2.pop %v329
        %v338 = vmul.f32 %v337, 0.6931472
        %v339 = vlog2.pop %v330
        %v340 = vmul.f32 %v339, 0.6931472
        %v341 = vmul.f32 %v335, %v338
        %v342 = vmul.f32 %v336, %v340
        %vm343 = vcmask 130048
        %344 = vst.msk [vmem:[%s238] sm:$0xff] %vm343, %v341
        %345 = vst.msk [vmem:[%s238 + $0x8] sm:$0xff] %vm343, %v342
        %s346 = sand.u32 %s113, 1
        %s347 = scalar_lea.sflag [#allocation4], %s346
        %s348 = sand.u32 %s113, 1
        %s349 = smul.addr %s348, 16
        %s350 = scalar_lea.vmem [#allocation7], %s349
        // Predicated region
        $region37: #{tpu_custom_call.1} parent=27 // pred_check
          %p351 = pneg %p123
        $region38: #{tpu_custom_call.1} parent=27 // pred_check_branch
          %353 = sbr.rel (%p351) target = $region40
        $region39: #{tpu_custom_call.1} parent=27 // pred_region
          %s354 = smul.u32 2, %s28
          %s356 = ssub.s32 256, 256
          %357 = vsyncadd %s347, %s356
          %s358 = sadd.s32 %s29, %s354
          %s359 = smul.addr %s27, 2
          %s360 = sadd.s32 %s358, %s359
          %s361 = smul.addr %s360, 128
          %s362 = scalar_lea.hbm %s2, %s361
          %s363 = sshll.u32 %s350, 4
          %s364 = int_to_ptr.vmem [resolvable:$true] %s363
          %369 = dma.vmem_to_hbm [thread:$0]  %s364, 256, %s362, %s347, 128, 128, 8
        $region40: #{tpu_custom_call.1} parent=27 // pred_fallthru
          _
      $region28: #{tpu_custom_call.1} parent=5 // pred_fallthru
        _
      %p370 = scmp.le.s32.totalorder 2, %s17
      // Predicated region
      $region41: #{tpu_custom_call.1} parent=5 // pred_check
        %p371 = pneg %p370
      $region42: #{tpu_custom_call.1} parent=5 // pred_check_branch
        %373 = sbr.rel (%p371) target = $region44
      $region43: #{tpu_custom_call.1} parent=5 // pred_region
        %s374 = ssub.s32 %s17, 2
        // Predicated region
        $region45: #{tpu_custom_call.1} parent=43 // pred_check
          %p375 = pneg %p129
        $region46: #{tpu_custom_call.1} parent=43 // pred_check_branch
          %377 = sbr.rel (%p375) target = $region48
        $region47: #{tpu_custom_call.1} parent=43 // pred_region
          %s378 = sand.u32 %s114, 1
          %s379 = scalar_lea.sflag [#allocation4], %s378
          %s380 = sand.u32 %s114, 1
          %s381 = smul.addr %s380, 16
          %s382 = scalar_lea.vmem [#allocation7], %s381
          %383 = dma.done %s379, 256
        $region48: #{tpu_custom_call.1} parent=43 // pred_fallthru
          _
      $region44: #{tpu_custom_call.1} parent=5 // pred_fallthru
        _
    $region6: #{tpu_custom_call.1} parent=1 // loop_footer
      %s21 = sadd.s32 1, %s17
    $region7: #{tpu_custom_call.1} parent=1 // loop_footer_branch
      %16 = sbr.rel target = $region3
    $region8: #{tpu_custom_call.1} parent=1 // loop_exit
      _
    %384 = vsyncpa [#allocation3], 1
    %s385 = scalar_lea.sflag [#allocation3], 1
    %386 = vsyncpa %s385, 1
    %387 = vsyncpa [#allocation6], 1
    %s388 = scalar_lea.sflag [#allocation6], 1
    %389 = vsyncpa %s388, 1
    %390 = vsyncpa [#allocation4], 1
    %s391 = scalar_lea.sflag [#allocation4], 1
    %392 = vsyncpa %s391, 1

</llo_original>
